<compile_context>
chip_gen: v6e
topology: v6e:2x2x1
jax: 0.10.0
libtpu: 0.0.40
codegen_flags: <defaults>
</compile_context>

<pallas_src>
import jax
import jax.numpy as jnp
from jax.experimental import pallas as pl
from jax.experimental.pallas import tpu as pltpu

HIDDEN = 3  # len([Quadratic, Sin, Exponential])


def combined_sequence_kernel(x_ref, w1_ref, b1_ref, w2_ref, b2_ref, out_ref):
    # linear1 on the MXU: (TB, D_in) @ (D_in, 3) + (1, 3), f32 accumulate.
    h = jnp.dot(
        x_ref[...].astype(jnp.float32),
        w1_ref[...].astype(jnp.float32),
        preferred_element_type=jnp.float32,
    )
    h = h + b1_ref[...]

    # Per-column activations (each applied only to its own column).
    a0 = h[:, 0:1] * h[:, 0:1]      # Quadratic (VPU)
    a1 = jnp.sin(h[:, 1:2])         # Sin (EUP)
    a2 = jnp.exp(h[:, 2:3])         # Exponential (EUP)

    # linear2 as VPU broadcast-FMA over the (TB, TN) output tile.
    w2 = w2_ref[...]
    out = a0 * w2[0:1, :] + a1 * w2[1:2, :] + a2 * w2[2:3, :] + b2_ref[...]
    out_ref[...] = out.astype(out_ref.dtype)


def _pick_batch_tile(b, cap):
    """Largest usable row tile without padding x in HBM."""
    cap = max(8, cap)
    if b <= cap:
        return b                      # single block == full batch dim
    t = (cap // 8) * 8
    # Prefer a multiple of 8 that divides B exactly (no ragged final block).
    for cand in range(t, 7, -8):
        if b % cand == 0:
            return cand
    # Ragged final block: Pallas pads OOB reads and drops OOB writes.
    return t


def _pick_out_tile(d_out):
    """Tile D_out only when it is wide and 128-divisible; else one full tile."""
    if d_out >= 2048 and d_out % 128 == 0:
        t = (min(2048, d_out) // 128) * 128
        while t >= 128:
            if d_out % t == 0:
                return t
            t -= 128
    return d_out


def _batch_axis_semantics():
    """CORE_PARALLEL on v7x (2 TCs/chip); plain parallel elsewhere."""
    try:
        kind = jax.devices()[0].device_kind.lower()
        if "v7" in kind:
            return pltpu.CORE_PARALLEL
    except Exception:
        pass
    return "parallel"


def combined_sequence(x, w1, b1, w2, b2):
    """x: (B, D_in); w1: (D_in, 3); b1: (3,); w2: (3, D_out); b2: (D_out,)."""
    B, d_in = x.shape
    d_out = w2.shape[1]

    # Generation-aware VMEM budgeting.
    try:
        vmem_cap = int(getattr(pltpu.get_tpu_info(), "vmem_capacity_bytes", 64 << 20))
    except Exception:
        vmem_cap = 64 << 20
    vmem_limit = min(vmem_cap * 3 // 4, 96 << 20)   # v5e/v6e: 96 MiB, v7x: 48 MiB
    budget = vmem_limit // 2                        # headroom for Mosaic temporaries

    tn = _pick_out_tile(d_out)
    itemsize = jnp.dtype(x.dtype).itemsize
    # Double-buffered x + out tiles, plus f32 intermediates (h, a0..a2, FMA temps).
    bytes_per_row = 2 * d_in * itemsize + 2 * tn * itemsize + 4 * (HIDDEN + 4 * tn)
    weight_bytes = 2 * 4 * (d_in * HIDDEN + HIDDEN + HIDDEN * tn + tn)
    max_tb = max(8, int((budget - weight_bytes) // max(bytes_per_row, 1)))
    max_tb = min(max_tb, 8192)
    tb = _pick_batch_tile(B, max_tb)

    grid = (pl.cdiv(B, tb), d_out // tn)

    out = pl.pallas_call(
        combined_sequence_kernel,
        out_shape=jax.ShapeDtypeStruct((B, d_out), x.dtype),
        grid=grid,
        in_specs=[
            pl.BlockSpec((tb, d_in), lambda i, j: (i, 0)),
            # Constant index_maps -> weights/biases stay VMEM-resident.
            pl.BlockSpec((d_in, HIDDEN), lambda i, j: (0, 0)),
            pl.BlockSpec((1, HIDDEN), lambda i, j: (0, 0)),
            pl.BlockSpec((HIDDEN, tn), lambda i, j: (0, j)),
            pl.BlockSpec((1, tn), lambda i, j: (0, j)),
        ],
        out_specs=pl.BlockSpec((tb, tn), lambda i, j: (i, j)),
        compiler_params=pltpu.CompilerParams(
            dimension_semantics=(_batch_axis_semantics(), "parallel"),
            vmem_limit_bytes=vmem_limit,
        ),
    )(x, w1, b1.reshape(1, -1), w2, b2.reshape(1, -1))
    return out


def torch_linear_init(key, fan_in, fan_out):
    """Deterministic init mimicking torch.nn.Linear: U(-1/sqrt(fan_in), +1/sqrt(fan_in))."""
    kw, kb = jax.random.split(key)
    bound = 1.0 / jnp.sqrt(jnp.float32(fan_in))
    # stored as (in, out) so the kernel uses it directly (torch stores (out, in))
    w = jax.random.uniform(kw, (fan_in, fan_out), jnp.float32, -bound, bound)
    b = jax.random.uniform(kb, (fan_out,), jnp.float32, -bound, bound)
    return w, b


def reference(x, w1, b1, w2, b2):
    h = x @ w1 + b1
    act = jnp.concatenate(
        [h[:, 0:1] ** 2, jnp.sin(h[:, 1:2]), jnp.exp(h[:, 2:3])], axis=1
    )
    return act @ w2 + b2


if __name__ == "__main__":
    input_size = 32
    output_size = 16
    batch = 8

    key = jax.random.PRNGKey(0)
    kx, k1, k2 = jax.random.split(key, 3)

    x = jax.random.normal(kx, (batch, input_size), jnp.float32)
    w1, b1 = torch_linear_init(k1, input_size, HIDDEN)
    w2, b2 = torch_linear_init(k2, HIDDEN, output_size)

    out = combined_sequence(x, w1, b1, w2, b2)
    out = jax.block_until_ready(out)

    ref = reference(x, w1, b1, w2, b2)
    assert out.shape == (batch, output_size)
    assert jnp.allclose(out, ref, atol=1e-5, rtol=1e-5), "mismatch vs reference"

    print("KERNEL_OK")
</pallas_src>

<mosaic_0001>
module attributes {stable_mosaic.version = 11 : i64} {
  func.func @combined_sequence_kernel(%arg0: i32, %arg1: i32, %arg2: memref<8x32xf32, #tpu.memory_space<vmem>>, %arg3: memref<32x3xf32, #tpu.memory_space<vmem>>, %arg4: memref<1x3xf32, #tpu.memory_space<vmem>>, %arg5: memref<3x16xf32, #tpu.memory_space<vmem>>, %arg6: memref<1x16xf32, #tpu.memory_space<vmem>>, %arg7: memref<8x16xf32, #tpu.memory_space<vmem>>) attributes {dimension_semantics = [#tpu.dimension_semantics<parallel>, #tpu.dimension_semantics<parallel>], iteration_bounds = array<i64: 1, 1>, scalar_prefetch = 0 : i64, scratch_operands = 0 : i64, tpu.core_type = #tpu.core_type<tc>, window_params = [{transform_indices = @transform_0, window_bounds = array<i64: 8, 32>}, {pipeline_mode = #tpu.pipeline_mode<synchronous>, transform_indices = @transform_1, window_bounds = array<i64: 32, 3>}, {pipeline_mode = #tpu.pipeline_mode<synchronous>, transform_indices = @transform_2, window_bounds = array<i64: 1, 3>}, {transform_indices = @transform_3, window_bounds = array<i64: 3, 16>}, {transform_indices = @transform_4, window_bounds = array<i64: 1, 16>}, {transform_indices = @transform_5, window_bounds = array<i64: 8, 16>}]} {
    %c0 = arith.constant 0 : index
    %c0_0 = arith.constant 0 : index
    %0 = vector.load %arg2[%c0, %c0_0] : memref<8x32xf32, #tpu.memory_space<vmem>>, vector<8x32xf32>
    %c0_1 = arith.constant 0 : index
    %c0_2 = arith.constant 0 : index
    %1 = vector.load %arg3[%c0_1, %c0_2] : memref<32x3xf32, #tpu.memory_space<vmem>>, vector<32x3xf32>
    %cst = arith.constant dense<0.000000e+00> : vector<8x3xf32>
    %2 = tpu.matmul %0, %1, %cst {dimension_numbers = #tpu.dot_dimension_numbers<[1], [0], [0], [1], [0, 0, 1, 1], [], []>} : vector<8x32xf32>, vector<32x3xf32>, vector<8x3xf32> -> vector<8x3xf32>
    %c0_3 = arith.constant 0 : index
    %c0_4 = arith.constant 0 : index
    %3 = vector.load %arg4[%c0_3, %c0_4] : memref<1x3xf32, #tpu.memory_space<vmem>>, vector<1x3xf32>
    %4 = vector.broadcast %3 : vector<1x3xf32> to vector<8x3xf32>
    %5 = arith.addf %2, %4 : vector<8x3xf32>
    %6 = vector.extract_strided_slice %5 {offsets = [0, 0], sizes = [8, 1], strides = [1, 1]} : vector<8x3xf32> to vector<8x1xf32>
    %7 = vector.extract_strided_slice %5 {offsets = [0, 0], sizes = [8, 1], strides = [1, 1]} : vector<8x3xf32> to vector<8x1xf32>
    %8 = arith.mulf %6, %7 : vector<8x1xf32>
    %9 = vector.extract_strided_slice %5 {offsets = [0, 1], sizes = [8, 1], strides = [1, 1]} : vector<8x3xf32> to vector<8x1xf32>
    %10 = math.sin %9 : vector<8x1xf32>
    %11 = vector.extract_strided_slice %5 {offsets = [0, 2], sizes = [8, 1], strides = [1, 1]} : vector<8x3xf32> to vector<8x1xf32>
    %12 = math.exp %11 : vector<8x1xf32>
    %c0_5 = arith.constant 0 : index
    %c0_6 = arith.constant 0 : index
    %13 = vector.load %arg5[%c0_5, %c0_6] : memref<3x16xf32, #tpu.memory_space<vmem>>, vector<3x16xf32>
    %14 = vector.extract_strided_slice %13 {offsets = [0, 0], sizes = [1, 16], strides = [1, 1]} : vector<3x16xf32> to vector<1x16xf32>
    %15 = vector.broadcast %8 : vector<8x1xf32> to vector<8x16xf32>
    %16 = vector.broadcast %14 : vector<1x16xf32> to vector<8x16xf32>
    %17 = arith.mulf %15, %16 : vector<8x16xf32>
    %18 = vector.extract_strided_slice %13 {offsets = [1, 0], sizes = [1, 16], strides = [1, 1]} : vector<3x16xf32> to vector<1x16xf32>
    %19 = vector.broadcast %10 : vector<8x1xf32> to vector<8x16xf32>
    %20 = vector.broadcast %18 : vector<1x16xf32> to vector<8x16xf32>
    %21 = arith.mulf %19, %20 : vector<8x16xf32>
    %22 = arith.addf %17, %21 : vector<8x16xf32>
    %23 = vector.extract_strided_slice %13 {offsets = [2, 0], sizes = [1, 16], strides = [1, 1]} : vector<3x16xf32> to vector<1x16xf32>
    %24 = vector.broadcast %12 : vector<8x1xf32> to vector<8x16xf32>
    %25 = vector.broadcast %23 : vector<1x16xf32> to vector<8x16xf32>
    %26 = arith.mulf %24, %25 : vector<8x16xf32>
    %27 = arith.addf %22, %26 : vector<8x16xf32>
    %c0_7 = arith.constant 0 : index
    %c0_8 = arith.constant 0 : index
    %28 = vector.load %arg6[%c0_7, %c0_8] : memref<1x16xf32, #tpu.memory_space<vmem>>, vector<1x16xf32>
    %29 = vector.broadcast %28 : vector<1x16xf32> to vector<8x16xf32>
    %30 = arith.addf %27, %29 : vector<8x16xf32>
    %c0_9 = arith.constant 0 : index
    %c0_10 = arith.constant 0 : index
    %31 = vector.load %arg7[%c0_9, %c0_10] : memref<8x16xf32, #tpu.memory_space<vmem>>, vector<8x16xf32>
    tpu.vector_store %arg7[%c0_9, %c0_10], %30 {strides = array<i32>} : memref<8x16xf32, #tpu.memory_space<vmem>>, vector<8x16xf32>,
    return
  }
  func.func @transform_0(%arg0: i32, %arg1: i32) -> (i32, i32) {
    %c0_i32 = arith.constant 0 : i32
    %c0_i32_0 = arith.constant 0 : i32
    return %arg0, %c0_i32 : i32, i32
  }
  func.func @transform_1(%arg0: i32, %arg1: i32) -> (i32, i32) {
    %c0_i32 = arith.constant 0 : i32
    %c0_i32_0 = arith.constant 0 : i32
    %c0_i32_1 = arith.constant 0 : i32
    return %c0_i32, %c0_i32_0 : i32, i32
  }
  func.func @transform_2(%arg0: i32, %arg1: i32) -> (i32, i32) {
    %c0_i32 = arith.constant 0 : i32
    %c0_i32_0 = arith.constant 0 : i32
    %c0_i32_1 = arith.constant 0 : i32
    return %c0_i32, %c0_i32_0 : i32, i32
  }
  func.func @transform_3(%arg0: i32, %arg1: i32) -> (i32, i32) {
    %c0_i32 = arith.constant 0 : i32
    %c0_i32_0 = arith.constant 0 : i32
    return %c0_i32, %arg1 : i32, i32
  }
  func.func @transform_4(%arg0: i32, %arg1: i32) -> (i32, i32) {
    %c0_i32 = arith.constant 0 : i32
    %c0_i32_0 = arith.constant 0 : i32
    return %c0_i32, %arg1 : i32, i32
  }
  func.func @transform_5(%arg0: i32, %arg1: i32) -> (i32, i32) {
    %c0_i32 = arith.constant 0 : i32
    return %arg0, %arg1 : i32, i32
  }
}

</mosaic_0001>

<llo_original>
// kernel: tpu_custom_call.1
$region0: #{tpu_custom_call.1}
  #allocation0 [shape = 'u32[]', space=smem, size = 0x4, offset = 0x4, fixed_abs, tag = 'smem constant byte address 0x4 - core index']
  #allocation1 [shape = 'u32[144,128]{1,0:T(1,128)}', space=vmem, size = 0x12000, scoped, tag = 'internal scratch']
  %s0 = inlined_call_operand.vmem [shape: f32[8,32], index: 0, kind: input, shape index: {}]
  %s1 = inlined_call_operand.vmem [shape: f32[32,3], index: 1, kind: input, shape index: {}]
  %s2 = inlined_call_operand.vmem [shape: f32[1,3], index: 2, kind: input, shape index: {}]
  %s3 = inlined_call_operand.vmem [shape: f32[3,16], index: 3, kind: input, shape index: {}]
  %s4 = inlined_call_operand.vmem [shape: f32[1,16], index: 4, kind: input, shape index: {}]
  %s5 = inlined_call_operand.hbm [shape: f32[8,16], index: 5, kind: output, shape index: {}]
  %s6 = sld [smem:[#allocation0]]
  $region30: #{tpu_custom_call.1} parent=0
    _
  %s8 = ssub.s32 1, %s6
  %s9 = scalar_select 0, %s8, %s6
  $region1: #{tpu_custom_call.1} parent=0
    #allocation2 [shape = 'u8[4096]{0}', space=vmem, size = 0x1000, scoped, tag = 'output window, operand 0, single buffered']
    #allocation3 [shape = 's32[1]{0}', space=sflag, size = 0x4, scoped, tag = 'scoped memory for tpu_custom_call.1']
    %10 = vsyncpa [#allocation3], 0
    // Predicated region
    $region2: #{tpu_custom_call.1} parent=1 // pred_check
      _
    $region3: #{tpu_custom_call.1} parent=1 // pred_check_branch
      %12 = sbr.rel (0) target = $region5
    $region4: #{tpu_custom_call.1} parent=1 // pred_region
      _
    $region5: #{tpu_custom_call.1} parent=1 // pred_fallthru
      _
    // Predicated region
    $region6: #{tpu_custom_call.1} parent=1 // pred_check
      _
    $region7: #{tpu_custom_call.1} parent=1 // pred_check_branch
      %14 = sbr.rel (0) target = $region9
    $region8: #{tpu_custom_call.1} parent=1 // pred_region
      _
    $region9: #{tpu_custom_call.1} parent=1 // pred_fallthru
      _
    // Predicated region
    $region10: #{tpu_custom_call.1} parent=1 // pred_check
      _
    $region11: #{tpu_custom_call.1} parent=1 // pred_check_branch
      %16 = sbr.rel (0) target = $region13
    $region12: #{tpu_custom_call.1} parent=1 // pred_region
      _
    $region13: #{tpu_custom_call.1} parent=1 // pred_fallthru
      _
    // Predicated region
    $region14: #{tpu_custom_call.1} parent=1 // pred_check
      _
    $region15: #{tpu_custom_call.1} parent=1 // pred_check_branch
      %18 = sbr.rel (0) target = $region17
    $region16: #{tpu_custom_call.1} parent=1 // pred_region
      _
    $region17: #{tpu_custom_call.1} parent=1 // pred_fallthru
      _
    // Predicated region
    $region18: #{tpu_custom_call.1} parent=1 // pred_check
      _
    $region19: #{tpu_custom_call.1} parent=1 // pred_check_branch
      %20 = sbr.rel (0) target = $region21
    $region20: #{tpu_custom_call.1} parent=1 // pred_region
      _
    $region21: #{tpu_custom_call.1} parent=1 // pred_fallthru
      _
    %v21 = vld [vmem:[%s0] sm:$0xff]
    %v22 = vld [vmem:[%s1] sm:$0xff]
    %v23 = vld [vmem:[%s1 + $0x8] sm:$0xff]
    %v24 = vld [vmem:[%s1 + $0x10] sm:$0xff]
    %v25 = vld [vmem:[%s1 + $0x18] sm:$0xff]
    %v26 = vld [vmem:[%s2] sm:$0x1]
    %v28 = vlaneseq
    %v29 = vshrl.u32 %v28, 7
    %v30 = vsub.s32 0, %v29
    %v31 = vrot.slane %v26, %v30
    %vm33 = vcmask 261120
    %v35 = vsel %vm33, %v21, 0
    %37 = vmatprep.subr.mxu0 0.0
    %38 = vmatpush1.msra.mxu0 0.0
    %39 = vmatprep.subr.mxu0 0.0
    %40 = vmatpush1.msra.mxu0 0.0
    %41 = vmatprep.subr.mxu0 0.0
    %42 = vmatpush1.msra.mxu0 0.0
    %43 = vmatprep.subr.mxu0 0.0
    %44 = vmatpush1.msra.mxu0 0.0
    %45 = vmatprep.subr.mxu0 0.0
    %46 = vmatpush1.msra.mxu0 0.0
    %47 = vmatprep.subr.mxu0 0.0
    %48 = vmatpush1.msra.mxu0 0.0
    %49 = vmatprep.subr.mxu0 0.0
    %50 = vmatpush1.msra.mxu0 0.0
    %51 = vmatprep.subr.mxu0 0.0
    %52 = vmatpush1.msra.mxu0 0.0
    %53 = vmatprep.subr.mxu0 0.0
    %54 = vmatpush1.msra.mxu0 0.0
    %55 = vmatprep.subr.mxu0 0.0
    %56 = vmatpush1.msra.mxu0 0.0
    %57 = vmatprep.subr.mxu0 0.0
    %58 = vmatpush1.msra.mxu0 0.0
    %59 = vmatprep.subr.mxu0 0.0
    %60 = vmatpush1.msra.mxu0 0.0
    %61 = vmatprep.subr.mxu0 0.0
    %62 = vmatpush1.msra.mxu0 %v25
    %63 = vmatprep.subr.mxu0 0.0
    %64 = vmatpush1.msra.mxu0 %v24
    %65 = vmatprep.subr.mxu0 0.0
    %66 = vmatpush1.msra.mxu0 %v23
    %67 = vmatprep.subr.mxu0 0.0
    %68 = vmatpush1.msra.mxu0 %v22
    %69 = vmatprep.subr.mxu0 0.0
    %70 = vmatpush2.msra.mxu0 0.0
    %71 = vmatprep.subr.mxu0 0.0
    %72 = vmatpush2.msra.mxu0 0.0
    %73 = vmatprep.subr.mxu0 0.0
    %74 = vmatpush2.msra.mxu0 0.0
    %75 = vmatprep.subr.mxu0 0.0
    %76 = vmatpush2.msra.mxu0 0.0
    %77 = vmatprep.subr.mxu0 0.0
    %78 = vmatpush2.msra.mxu0 0.0
    %79 = vmatprep.subr.mxu0 0.0
    %80 = vmatpush2.msra.mxu0 0.0
    %81 = vmatprep.subr.mxu0 0.0
    %82 = vmatpush2.msra.mxu0 0.0
    %83 = vmatprep.subr.mxu0 0.0
    %84 = vmatpush2.msra.mxu0 0.0
    %85 = vmatprep.subr.mxu0 0.0
    %86 = vmatpush2.msra.mxu0 0.0
    %87 = vmatprep.subr.mxu0 0.0
    %88 = vmatpush2.msra.mxu0 0.0
    %89 = vmatprep.subr.mxu0 0.0
    %90 = vmatpush2.msra.mxu0 0.0
    %91 = vmatprep.subr.mxu0 0.0
    %92 = vmatpush2.msra.mxu0 0.0
    %93 = vmatprep.subr.mxu0 0.0
    %94 = vmatpush2.msra.mxu0 0.0
    %95 = vmatprep.subr.mxu0 0.0
    %96 = vmatpush2.msra.mxu0 0.0
    %97 = vmatprep.subr.mxu0 0.0
    %98 = vmatpush2.msra.mxu0 0.0
    %99 = vmatprep.subr.mxu0 0.0
    %100 = vmatpush2.msra.mxu0 0.0
    %101 = vmatprep.mubr.f32.mxu0 0.0
    %102 = vmatmul.mubr.f32.gmra.mxu0 %v35
    %v103 = vpop.f32.mrf.mxu0
    %v104 = vadd.f32 %v31, %v103
    %v105 = vpop.f32.mrf.mxu0
    %106 = vdwg.mxu0
    %v107 = vmul.f32 %v104, %v104
    %v108 = vand.u32 2147483647, %v104
    %vm109 = vcmp.le.f32.partialorder %v108, 0.7853982
    %vm110 = vcmp.lt.s32.totalorder %v104, 0
    %v111 = vand.u32 %v104, 2139095040
    %v112 = vshrl.u32 %v111, 23
    %v113 = vsub.s32 %v112, 127
    %v114 = vand.u32 2147483647, %v104
    %v115 = vand.u32 %v114, 8388607
    %v116 = vor.u32 %v115, 8388608
    %v117 = vsub.s32 0, %v116
    %v118 = vadd.s32 %v113, 1
    %vm119 = vcmp.gt.s32.totalorder %v118, 0
    %v120 = vsel %vm119, %v118, 0
    %v121 = vshrl.u32 %v120, 5
    %v122 = vand.u32 %v120, 31
    %v123 = vsub.s32 32, %v122
    %v124 = vshrl.u32 683565275, %v123
    %v125 = vshll.u32 683565275, %v122
    %v126 = vshrl.u32 2475754826, %v123
    %v127 = vor.u32 %v125, %v126
    %v128 = vshll.u32 2475754826, %v122
    %v129 = vshrl.u32 2131351028, %v123
    %v130 = vor.u32 %v128, %v129
    %v131 = vshll.u32 2131351028, %v122
    %v132 = vshrl.u32 2102212464, %v123
    %v133 = vor.u32 %v131, %v132
    %v134 = vshll.u32 2102212464, %v122
    %v135 = vshrl.u32 920167782, %v123
    %v136 = vor.u32 %v134, %v135
    %v137 = vshll.u32 920167782, %v122
    %v138 = vshrl.u32 1326507024, %v123
    %v139 = vor.u32 %v137, %v138
    %vm140 = vcmp.lt.s32.totalorder %v121, 1
    %vm141 = vcmp.lt.s32.totalorder %v121, 2
    %vm142 = vcmp.lt.s32.totalorder %v121, 3
    %vm143 = vcmp.lt.s32.totalorder %v121, 4
    %v144 = vsel %vm140, %v124, %v127
    %v145 = vsel %vm143, %v133, 2102212464
    %v146 = vsel %vm142, %v130, %v145
    %v147 = vsel %vm141, %v144, %v146
    %v148 = vsel %vm140, %v127, %v130
    %v149 = vsel %vm143, %v136, 920167782
    %v150 = vsel %vm142, %v133, %v149
    %v151 = vsel %vm141, %v148, %v150
    %v152 = vsel %vm140, %v130, %v133
    %v153 = vsel %vm143, %v139, 1326507024
    %v154 = vsel %vm142, %v136, %v153
    %v155 = vsel %vm141, %v152, %v154
    %v156 = vshll.u32 %v116, 8
    %v157 = vmul.u32.u64.compose %v156, %v155
    %v158 = vextract.low.u32 %v157
    %v159 = vextract.high.u32 %v157
    %v160 = vmul.u32.u64.compose %v156, %v151
    %v161 = vextract.low.u32 %v160
    %v162 = vextract.high.u32 %v160
    %v163 = vmul.u32 %v156, %v147
    %v164 = vadd.s32 %v159, %v161
    %vm165 = vc.u32 %v159, %v161
    %v166 = vadd.s32 %v162, 1
    %v167 = vsel %vm165, %v166, %v162
    %v168 = vadd.s32 %v163, %v167
    %v169 = vadd.s32 %v168, 536870912
    %v170 = vshrl.u32 %v169, 30
    %v171 = vshll.u32 %v170, 30
    %v172 = vsub.s32 %v168, %v171
    %vm173 = vcmp.lt.s32.totalorder %v172, 0
    %v174 = vsub.s32 0, %v172
    %v175 = vsel %vm173, %v174, %v172
    %v176 = vclz %v175
    %v177 = vsub.s32 %v176, 2
    %vm178 = vcmp.gt.s32.totalorder 0, %v177
    %v179 = vsel %vm178, 0, %v177
    %v180 = vsub.s32 32, %v179
    %v181 = vshll.u32 %v172, %v179
    %v182 = vshrl.u32 %v164, %v180
    %v183 = vor.u32 %v181, %v182
    %v184 = vsub.s32 4294967266, %v179
    %v185 = vadd.s32 %v184, 127
    %v186 = vshll.u32 %v185, 23
    %v187 = vor.u32 4788187, %v186
    %v188 = vand.u32 2147483647, %v187
    %v190 = vcvt.s32.f32 %v183
    %v191 = vmul.f32 %v190, %v188
    %v192 = vxor.u32 %v191, 2147483648
    %v193 = vsel %vm110, %v192, %v191
    %v194 = vsub.s32 4, %v170
    %v195 = vsel %vm110, %v194, %v170
    %v196 = vsel %vm109, %v104, %v193
    %v197 = vsel %vm109, 0, %v195
    %v198 = vcosq.f32.pop %v196
    %v199 = vsinq.f32.pop %v196
    %vm200 = vweird.f32 %v104
    %v201 = vadd.s32 %v197, 3
    %v202 = vand.u32 %v201, 3
    %vm203 = vcmp.lt.s32.totalorder %v202, 2
    %vm204 = vcmp.eq.s32.totalorder %v202, 0
    %v205 = vxor.u32 %v199, 2147483648
    %v206 = vsel %vm204, %v198, %v205
    %vm207 = vcmp.eq.s32.totalorder %v202, 2
    %v208 = vxor.u32 %v198, 2147483648
    %v209 = vsel %vm207, %v208, %v199
    %v210 = vsel %vm203, %v206, %v209
    %v211 = vsel %vm200, nan, %v210
    %v212 = vmul.f32 %v104, 1.442695
    %v213 = vpow.pop %v212
    %v214 = vld [vmem:[%s3] sm:$0x7]
    %216 = vset.pattern.permute.xlu0 0
    %217 = vperm.xlu0 %216, %v107
    %v218 = vpop.permute.xlu0 %217
    %v220 = vlaneseq
    %v221 = vshrl.u32 %v220, 7
    %v222 = vsub.s32 0, %v221
    %v223 = vrot.slane %v214, %v222
    %v224 = vmul.f32 %v218, %v223
    %226 = vset.pattern.permute.xlu0 1
    %227 = vperm.xlu0 %226, %v211
    %v228 = vpop.permute.xlu0 %227
    %v230 = vlaneseq
    %v231 = vshrl.u32 %v230, 7
    %v232 = vsub.s32 1, %v231
    %v233 = vrot.slane %v214, %v232
    %v234 = vmul.f32 %v228, %v233
    %v235 = vadd.f32 %v224, %v234
    %237 = vset.pattern.permute.xlu0 2
    %238 = vperm.xlu0 %237, %v213
    %v239 = vpop.permute.xlu0 %238
    %v241 = vlaneseq
    %v242 = vshrl.u32 %v241, 7
    %v243 = vsub.s32 2, %v242
    %v244 = vrot.slane %v214, %v243
    %v245 = vmul.f32 %v239, %v244
    %v246 = vadd.f32 %v235, %v245
    %v247 = vld [vmem:[%s4] sm:$0x1]
    %v249 = vlaneseq
    %v250 = vshrl.u32 %v249, 7
    %v251 = vsub.s32 0, %v250
    %v252 = vrot.slane %v247, %v251
    %v254 = vadd.f32 %v246, %v252
    %vm255 = vcmask 130048
    %256 = vst.msk [vmem:[#allocation2] sm:$0xff] %vm255, %v254
    // Predicated region
    $region22: #{tpu_custom_call.1} parent=1 // pred_check
      _
    $region23: #{tpu_custom_call.1} parent=1 // pred_check_branch
      %258 = sbr.rel (0) target = $region25
    $region24: #{tpu_custom_call.1} parent=1 // pred_region
      %s260 = ssub.s32 128, 128
      %261 = vsyncadd [#allocation3], %s260
      %s263 = sshll.u32 [#allocation2], 4
      %s264 = int_to_ptr.vmem [resolvable:$true] %s263
      %266 = dma.vmem_to_hbm [thread:$0]  %s264, 128, %s5, [#allocation3]
    $region25: #{tpu_custom_call.1} parent=1 // pred_fallthru
      _
    // Predicated region
    $region26: #{tpu_custom_call.1} parent=1 // pred_check
      _
    $region27: #{tpu_custom_call.1} parent=1 // pred_check_branch
      %268 = sbr.rel (0) target = $region29
    $region28: #{tpu_custom_call.1} parent=1 // pred_region
      %269 = dma.done [#allocation3], 128
    $region29: #{tpu_custom_call.1} parent=1 // pred_fallthru
      _
    %270 = vsyncpa [#allocation3], 1

</llo_original>
